<compile_context>
chip_gen: v5e
topology: v5e:2x2
jax: 0.10.0
libtpu: 0.0.40
codegen_flags: <defaults>
</compile_context>

<pallas_src>
import jax
import jax.numpy as jnp
from jax.experimental import pallas as pl
from jax.experimental.pallas import tpu as pltpu


# ----------------------------------------------------------------------------
# Fused kernel.  One grid step = NB batch elements (NB*T matmul rows).
#   xs_ref : (NB, Tp, C*S)     causally padded input, channel-last
#   w1_ref : (past_t, C*S, H)  Conv2d weight per tap, BN2d scale folded in
#   sh1_ref: (1, H)            folded Conv2d bias + BN2d(eval) shift
#   wc_ref : (T, H, t_out*P)   convT x Conv1d(k=1) x BN1d folded weight
#   bo_ref : (1, t_out*P)      folded convT/Conv1d bias + BN1d shift
#   o_ref  : (NB, t_out*P)     lane-dense output slab
#   h1_scr : VMEM (NB, T, H)   post-ReLU activations (never leave VMEM)
# ----------------------------------------------------------------------------
def _sann_fused_kernel(xs_ref, w1_ref, sh1_ref, wc_ref, bo_ref, o_ref, h1_scr):
    nb, t_pad, cs = xs_ref.shape
    past_t, _, hdim = w1_ref.shape
    t_inp = t_pad - past_t + 1

    xs = xs_ref[...]                                   # (NB, Tp, C*S)

    # --- Conv2d(kernel=(past_t, n_points)): causal im2col done in-kernel as
    #     past_t accumulated matmuls over shifted time windows (M = NB*T). ---
    acc = jnp.dot(xs[:, 0:t_inp, :].reshape(nb * t_inp, cs), w1_ref[0],
                  preferred_element_type=jnp.float32)
    for dt in range(1, past_t):
        acc = acc + jnp.dot(xs[:, dt:dt + t_inp, :].reshape(nb * t_inp, cs),
                            w1_ref[dt], preferred_element_type=jnp.float32)

    # --- BN2d(eval) shift (scale folded into w1, conv bias folded in) + ReLU.
    h1 = jnp.maximum(acc + sh1_ref[...], 0.0)          # (NB*T, H) f32
    h1_scr[...] = h1.reshape(nb, t_inp, hdim)          # stays in VMEM

    # --- ConvTranspose2d + Dropout2d(eval=identity) + Conv1d(k=1) + BN1d,
    #     all pre-folded into wc[t]:  o[n, o*P+p] = sum_t h1[n,t,:] @ wc[t]. ---
    o = jnp.dot(h1_scr[:, 0, :].astype(wc_ref.dtype), wc_ref[0],
                preferred_element_type=jnp.float32)
    for ts in range(1, t_inp):
        o = o + jnp.dot(h1_scr[:, ts, :].astype(wc_ref.dtype), wc_ref[ts],
                        preferred_element_type=jnp.float32)
    o_ref[...] = (o + bo_ref[...]).astype(o_ref.dtype)


# ----------------------------------------------------------------------------
# Parameter init (matches the PyTorch module's tensor shapes).
# ----------------------------------------------------------------------------
def init_params(key, n_inp, n_out, t_inp, t_out, n_points, past_t, hidden_dim):
    H = hidden_dim
    ks = jax.random.split(key, 14)
    p = {}
    p["conv_w"] = 0.1 * jax.random.normal(ks[0], (H, n_inp, past_t, n_points), jnp.float32)
    p["conv_b"] = 0.1 * jax.random.normal(ks[1], (H,), jnp.float32)
    p["bn1_g"] = 1.0 + 0.1 * jax.random.normal(ks[2], (H,), jnp.float32)
    p["bn1_b"] = 0.1 * jax.random.normal(ks[3], (H,), jnp.float32)
    p["bn1_m"] = 0.1 * jax.random.normal(ks[4], (H,), jnp.float32)
    p["bn1_v"] = jnp.abs(1.0 + 0.1 * jax.random.normal(ks[5], (H,), jnp.float32))
    p["convT_w"] = 0.1 * jax.random.normal(ks[6], (H, H, 1, n_points), jnp.float32)
    p["convT_b"] = 0.1 * jax.random.normal(ks[7], (H,), jnp.float32)
    p["reg_w"] = 0.1 * jax.random.normal(ks[8], (t_out, H * t_inp, 1), jnp.float32)
    p["reg_b"] = 0.1 * jax.random.normal(ks[9], (t_out,), jnp.float32)
    p["bn2_g"] = 1.0 + 0.1 * jax.random.normal(ks[10], (t_out,), jnp.float32)
    p["bn2_b"] = 0.1 * jax.random.normal(ks[11], (t_out,), jnp.float32)
    p["bn2_m"] = 0.1 * jax.random.normal(ks[12], (t_out,), jnp.float32)
    p["bn2_v"] = jnp.abs(1.0 + 0.1 * jax.random.normal(ks[13], (t_out,), jnp.float32))
    return p


# ----------------------------------------------------------------------------
# Host-side folding into the kernel's matmul-friendly layouts.
# ----------------------------------------------------------------------------
def _folded_params(params, *, n_inp, t_inp, t_out, n_points, past_t,
                   hidden_dim, eps=1e-5, compute_dtype=jnp.bfloat16):
    H, P, T, C = hidden_dim, n_points, t_inp, n_inp

    # Conv2d weight (H, C, past_t, P) -> per-tap (past_t, C*P, H); row index
    # c*P + s matches the channel-last (c*S + s) input slab.  BN2d scale folded
    # into the H columns; BN2d shift + conv bias folded into one (1, H) row.
    sc1 = params["bn1_g"] / jnp.sqrt(params["bn1_v"] + eps)
    w1 = (jnp.transpose(params["conv_w"], (2, 1, 3, 0)).reshape(past_t, C * P, H)
          * sc1[None, None, :])
    sh1 = (params["bn1_b"] + sc1 * (params["conv_b"] - params["bn1_m"])).reshape(1, H)

    # Fold ConvTranspose2d x Conv1d(k=1) x BN1d(eval) into one per-time-step
    # weight (exact because Dropout2d is identity in eval; the chain is linear):
    #   wc[t, h_in, o*P + p] = sc2[o] * sum_h reg_w[o, h*T + t] * convT_w[h_in, h, 0, p]
    sc2 = params["bn2_g"] / jnp.sqrt(params["bn2_v"] + eps)
    wr3 = params["reg_w"][..., 0].reshape(t_out, H, T)          # [o, h_out, t]
    cw = params["convT_w"][:, :, 0, :]                          # [h_in, h_out, p]
    wc = jnp.einsum("oht,ihp->tiop", wr3 * sc2[:, None, None], cw)
    wc = wc.reshape(T, H, t_out * P)
    bias_o = (sc2 * (jnp.einsum("oht,h->o", wr3, params["convT_b"])
                     + params["reg_b"] - params["bn2_m"]) + params["bn2_b"])
    bo = jnp.repeat(bias_o, P).reshape(1, t_out * P)

    cast = lambda a: a.astype(compute_dtype)
    return cast(w1), sh1.astype(jnp.float32), cast(wc), bo.astype(jnp.float32)


def _cdiv(a, b):
    return -(-a // b)


def _batches_per_block(n, t, *, bytes_per_batch, target_rows=2048, max_nb=512,
                       max_block_bytes=8 * 1024 * 1024):
    """Batch elements per grid step.  NB*t rows feed the MXU M dimension: aim
    for ~target_rows rows/step (amortizes the ~0.35us step overhead and weight
    pushes), keep NB 8-aligned, cap by VMEM block bytes, prefer >= 2 grid
    blocks (v7x megacore), and rebalance to limit padded-batch waste."""
    n8 = _cdiv(n, 8) * 8
    nb_rows = max(8, (target_rows // max(t, 1)) // 8 * 8)
    nb_mem = max(8, (max_block_bytes // max(bytes_per_batch, 1)) // 8 * 8)
    nb = min(max_nb, nb_rows, nb_mem, n8)
    if n8 >= 16 and _cdiv(n8, nb) < 2:          # give both v7x TCs a block
        nb = max(8, (n8 // 2) // 8 * 8)
    blocks = _cdiv(n8, nb)
    return max(8, _cdiv(_cdiv(n8, blocks), 8) * 8)


# ----------------------------------------------------------------------------
# Forward pass.
# ----------------------------------------------------------------------------
def sann_forward(params, x, *, n_out, t_out, n_points, past_t, hidden_dim,
                 use_bf16_matmul=True):
    N, C, T, S = x.shape
    H, P = hidden_dim, n_points
    assert S == n_points, "input width must equal n_points"
    assert n_out == 1, "the module's final .view() requires n_out == 1"
    compute_dtype = jnp.bfloat16 if use_bf16_matmul else jnp.float32
    itemsize = 2 if use_bf16_matmul else 4

    w1, sh1, wc, bo = _folded_params(
        params, n_inp=C, t_inp=T, t_out=t_out, n_points=P, past_t=past_t,
        hidden_dim=H, compute_dtype=compute_dtype)

    # Causal pad + channel-last transpose of the *raw* input only; the im2col
    # window expansion is done inside the kernel (HBM traffic stays 1x).
    Tp = T + past_t - 1
    xs = jnp.transpose(jnp.pad(x, ((0, 0), (0, 0), (past_t - 1, 0), (0, 0))),
                       (0, 2, 1, 3)).reshape(N, Tp, C * S).astype(compute_dtype)

    NB = _batches_per_block(N, T, bytes_per_batch=Tp * C * S * itemsize)
    n_blocks = _cdiv(N, NB)
    N_pad = n_blocks * NB
    if N_pad != N:
        xs = jnp.pad(xs, ((0, N_pad - N), (0, 0), (0, 0)))

    TOP = t_out * P
    out_flat = pl.pallas_call(
        _sann_fused_kernel,
        out_shape=jax.ShapeDtypeStruct((N_pad, TOP), jnp.float32),
        grid=(n_blocks,),
        in_specs=[
            pl.BlockSpec((NB, Tp, C * S), lambda i: (i, 0, 0)),
            pl.BlockSpec((past_t, C * S, H), lambda i: (0, 0, 0)),
            pl.BlockSpec((1, H), lambda i: (0, 0)),
            pl.BlockSpec((T, H, TOP), lambda i: (0, 0, 0)),
            pl.BlockSpec((1, TOP), lambda i: (0, 0)),
        ],
        out_specs=pl.BlockSpec((NB, TOP), lambda i: (i, 0)),
        scratch_shapes=[pltpu.VMEM((NB, T, H), jnp.float32)],
        compiler_params=pltpu.CompilerParams(
            dimension_semantics=("parallel",),    # v7x: both TCs take batch blocks
            vmem_limit_bytes=32 * 1024 * 1024),   # explicit; fits v5e/v6e/v7x
    )(xs, w1, sh1, wc, bo)

    # PyTorch: out.view(N, n_out, t_out, n_points) with n_out == 1 (asserted).
    return out_flat[:N].reshape(N, n_out, t_out, P)


# ----------------------------------------------------------------------------
# Pure-JAX reference mirroring the PyTorch module op-by-op (HIGHEST precision).
# ----------------------------------------------------------------------------
def sann_reference(params, x, *, n_out, t_out, n_points, past_t, hidden_dim,
                   eps=1e-5):
    N, C, T, S = x.shape
    H, P = hidden_dim, n_points
    hp = jax.lax.Precision.HIGHEST
    xp = jnp.pad(x, ((0, 0), (0, 0), (past_t - 1, 0), (0, 0)))
    win = jnp.stack([xp[:, :, dt:dt + T, :] for dt in range(past_t)], axis=3)
    c = (jnp.einsum("nctds,hcds->nht", win, params["conv_w"], precision=hp)
         + params["conv_b"][None, :, None])
    sc1 = params["bn1_g"] / jnp.sqrt(params["bn1_v"] + eps)
    h1 = jnp.maximum(sc1[None, :, None] * (c - params["bn1_m"][None, :, None])
                     + params["bn1_b"][None, :, None], 0.0)              # (N,H,T)
    h2 = (jnp.einsum("nit,iop->notp", h1, params["convT_w"][:, :, 0, :],
                     precision=hp) + params["convT_b"][None, :, None, None])
    v = h2.reshape(N, H * T, P)                                          # (h,t) rows
    r = (jnp.einsum("ok,nkp->nop", params["reg_w"][:, :, 0], v, precision=hp)
         + params["reg_b"][None, :, None])
    sc2 = params["bn2_g"] / jnp.sqrt(params["bn2_v"] + eps)
    o = (sc2[None, :, None] * (r - params["bn2_m"][None, :, None])
         + params["bn2_b"][None, :, None])
    return o.reshape(N, n_out, t_out, P)


if __name__ == "__main__":
    # Small shapes consistent with the module (n_out must be 1 for final view).
    N, n_inp, n_out = 2, 4, 1
    t_inp, t_out = 8, 8
    n_points, past_t, hidden_dim = 16, 3, 32
    cfg = dict(n_out=n_out, t_out=t_out, n_points=n_points, past_t=past_t,
               hidden_dim=hidden_dim)

    key = jax.random.PRNGKey(0)
    k_x, k_p, k_x2 = jax.random.split(key, 3)
    x = jax.random.normal(k_x, (N, n_inp, t_inp, n_points), jnp.float32)
    params = init_params(k_p, n_inp, n_out, t_inp, t_out, n_points, past_t,
                         hidden_dim)

    ref = sann_reference(params, x, **cfg)

    # 1) f32 MXU path: strict check of the host-side weight folding / layouts.
    out_f32 = jax.block_until_ready(
        sann_forward(params, x, use_bf16_matmul=False, **cfg))
    assert out_f32.shape == (N, n_out, t_out, n_points)
    assert jnp.allclose(out_f32, ref, atol=1e-2, rtol=1e-2)

    # 2) Default perf configuration (bf16 MXU operands, f32 accumulation) on a
    #    batch that exercises multiple grid blocks + batch padding.
    N2 = 19
    x2 = jax.random.normal(k_x2, (N2, n_inp, t_inp, n_points), jnp.float32)
    out2 = jax.block_until_ready(sann_forward(params, x2, **cfg))
    ref2 = sann_reference(params, x2, **cfg)
    assert out2.shape == (N2, n_out, t_out, n_points)
    assert jnp.allclose(out2, ref2, atol=6e-2, rtol=6e-2)

    print("KERNEL_OK")
</pallas_src>

<mosaic_0001>
module attributes {stable_mosaic.version = 11 : i64} {
  func.func @_sann_fused_kernel(%arg0: i32, %arg1: memref<8x10x64xf32, #tpu.memory_space<vmem>>, %arg2: memref<3x64x32xf32, #tpu.memory_space<vmem>>, %arg3: memref<1x32xf32, #tpu.memory_space<vmem>>, %arg4: memref<8x32x128xf32, #tpu.memory_space<vmem>>, %arg5: memref<1x128xf32, #tpu.memory_space<vmem>>, %arg6: memref<8x128xf32, #tpu.memory_space<vmem>>, %arg7: memref<8x8x32xf32, #tpu.memory_space<vmem>>) attributes {dimension_semantics = [#tpu.dimension_semantics<parallel>], iteration_bounds = array<i64: 1>, scalar_prefetch = 0 : i64, scratch_operands = 1 : i64, tpu.core_type = #tpu.core_type<tc>, window_params = [{transform_indices = @transform_0, window_bounds = array<i64: 8, 10, 64>}, {pipeline_mode = #tpu.pipeline_mode<synchronous>, transform_indices = @transform_1, window_bounds = array<i64: 3, 64, 32>}, {pipeline_mode = #tpu.pipeline_mode<synchronous>, transform_indices = @transform_2, window_bounds = array<i64: 1, 32>}, {pipeline_mode = #tpu.pipeline_mode<synchronous>, transform_indices = @transform_3, window_bounds = array<i64: 8, 32, 128>}, {pipeline_mode = #tpu.pipeline_mode<synchronous>, transform_indices = @transform_4, window_bounds = array<i64: 1, 128>}, {transform_indices = @transform_5, window_bounds = array<i64: 8, 128>}]} {
    %c0 = arith.constant 0 : index
    %c0_0 = arith.constant 0 : index
    %c0_1 = arith.constant 0 : index
    %0 = vector.load %arg1[%c0, %c0_0, %c0_1] : memref<8x10x64xf32, #tpu.memory_space<vmem>>, vector<8x10x64xf32>
    %1 = vector.extract_strided_slice %0 {offsets = [0, 0, 0], sizes = [8, 8, 64], strides = [1, 1, 1]} : vector<8x10x64xf32> to vector<8x8x64xf32>
    %2 = vector.shape_cast %1 : vector<8x8x64xf32> to vector<64x64xf32>
    %c0_2 = arith.constant 0 : index
    %c0_3 = arith.constant 0 : index
    %c0_4 = arith.constant 0 : index
    %3 = vector.load %arg2[%c0_2, %c0_3, %c0_4] : memref<3x64x32xf32, #tpu.memory_space<vmem>>, vector<1x64x32xf32>
    %4 = vector.shape_cast %3 : vector<1x64x32xf32> to vector<64x32xf32>
    %cst = arith.constant dense<0.000000e+00> : vector<64x32xf32>
    %5 = tpu.matmul %2, %4, %cst {dimension_numbers = #tpu.dot_dimension_numbers<[1], [0], [0], [1], [0, 0, 1, 1], [], []>} : vector<64x64xf32>, vector<64x32xf32>, vector<64x32xf32> -> vector<64x32xf32>
    %6 = vector.extract_strided_slice %0 {offsets = [0, 1, 0], sizes = [8, 8, 64], strides = [1, 1, 1]} : vector<8x10x64xf32> to vector<8x8x64xf32>
    %7 = vector.shape_cast %6 : vector<8x8x64xf32> to vector<64x64xf32>
    %c1 = arith.constant 1 : index
    %c0_5 = arith.constant 0 : index
    %c0_6 = arith.constant 0 : index
    %8 = vector.load %arg2[%c1, %c0_5, %c0_6] : memref<3x64x32xf32, #tpu.memory_space<vmem>>, vector<1x64x32xf32>
    %9 = vector.shape_cast %8 : vector<1x64x32xf32> to vector<64x32xf32>
    %cst_7 = arith.constant dense<0.000000e+00> : vector<64x32xf32>
    %10 = tpu.matmul %7, %9, %cst_7 {dimension_numbers = #tpu.dot_dimension_numbers<[1], [0], [0], [1], [0, 0, 1, 1], [], []>} : vector<64x64xf32>, vector<64x32xf32>, vector<64x32xf32> -> vector<64x32xf32>
    %11 = arith.addf %5, %10 : vector<64x32xf32>
    %12 = vector.extract_strided_slice %0 {offsets = [0, 2, 0], sizes = [8, 8, 64], strides = [1, 1, 1]} : vector<8x10x64xf32> to vector<8x8x64xf32>
    %13 = vector.shape_cast %12 : vector<8x8x64xf32> to vector<64x64xf32>
    %c2 = arith.constant 2 : index
    %c0_8 = arith.constant 0 : index
    %c0_9 = arith.constant 0 : index
    %14 = vector.load %arg2[%c2, %c0_8, %c0_9] : memref<3x64x32xf32, #tpu.memory_space<vmem>>, vector<1x64x32xf32>
    %15 = vector.shape_cast %14 : vector<1x64x32xf32> to vector<64x32xf32>
    %cst_10 = arith.constant dense<0.000000e+00> : vector<64x32xf32>
    %16 = tpu.matmul %13, %15, %cst_10 {dimension_numbers = #tpu.dot_dimension_numbers<[1], [0], [0], [1], [0, 0, 1, 1], [], []>} : vector<64x64xf32>, vector<64x32xf32>, vector<64x32xf32> -> vector<64x32xf32>
    %17 = arith.addf %11, %16 : vector<64x32xf32>
    %c0_11 = arith.constant 0 : index
    %c0_12 = arith.constant 0 : index
    %18 = vector.load %arg3[%c0_11, %c0_12] : memref<1x32xf32, #tpu.memory_space<vmem>>, vector<1x32xf32>
    %19 = vector.broadcast %18 : vector<1x32xf32> to vector<64x32xf32>
    %20 = arith.addf %17, %19 : vector<64x32xf32>
    %cst_13 = arith.constant 0.000000e+00 : f32
    %21 = vector.broadcast %cst_13 : f32 to vector<64x32xf32>
    %22 = arith.maximumf %20, %21 : vector<64x32xf32>
    %23 = vector.shape_cast %22 : vector<64x32xf32> to vector<8x8x32xf32>
    %c0_14 = arith.constant 0 : index
    %c0_15 = arith.constant 0 : index
    %c0_16 = arith.constant 0 : index
    %24 = vector.load %arg7[%c0_14, %c0_15, %c0_16] : memref<8x8x32xf32, #tpu.memory_space<vmem>>, vector<8x8x32xf32>
    tpu.vector_store %arg7[%c0_14, %c0_15, %c0_16], %23 {strides = array<i32>} : memref<8x8x32xf32, #tpu.memory_space<vmem>>, vector<8x8x32xf32>,
    %c0_17 = arith.constant 0 : index
    %c0_18 = arith.constant 0 : index
    %c0_19 = arith.constant 0 : index
    %25 = vector.load %arg7[%c0_17, %c0_18, %c0_19] : memref<8x8x32xf32, #tpu.memory_space<vmem>>, vector<8x1x32xf32>
    %26 = vector.shape_cast %25 : vector<8x1x32xf32> to vector<8x32xf32>
    %c0_20 = arith.constant 0 : index
    %c0_21 = arith.constant 0 : index
    %c0_22 = arith.constant 0 : index
    %27 = vector.load %arg4[%c0_20, %c0_21, %c0_22] : memref<8x32x128xf32, #tpu.memory_space<vmem>>, vector<1x32x128xf32>
    %28 = vector.shape_cast %27 : vector<1x32x128xf32> to vector<32x128xf32>
    %cst_23 = arith.constant dense<0.000000e+00> : vector<8x128xf32>
    %29 = tpu.matmul %26, %28, %cst_23 {dimension_numbers = #tpu.dot_dimension_numbers<[1], [0], [0], [1], [0, 0, 1, 1], [], []>} : vector<8x32xf32>, vector<32x128xf32>, vector<8x128xf32> -> vector<8x128xf32>
    %c0_24 = arith.constant 0 : index
    %c1_25 = arith.constant 1 : index
    %c0_26 = arith.constant 0 : index
    %30 = vector.load %arg7[%c0_24, %c1_25, %c0_26] : memref<8x8x32xf32, #tpu.memory_space<vmem>>, vector<8x1x32xf32>
    %31 = vector.shape_cast %30 : vector<8x1x32xf32> to vector<8x32xf32>
    %c1_27 = arith.constant 1 : index
    %c0_28 = arith.constant 0 : index
    %c0_29 = arith.constant 0 : index
    %32 = vector.load %arg4[%c1_27, %c0_28, %c0_29] : memref<8x32x128xf32, #tpu.memory_space<vmem>>, vector<1x32x128xf32>
    %33 = vector.shape_cast %32 : vector<1x32x128xf32> to vector<32x128xf32>
    %cst_30 = arith.constant dense<0.000000e+00> : vector<8x128xf32>
    %34 = tpu.matmul %31, %33, %cst_30 {dimension_numbers = #tpu.dot_dimension_numbers<[1], [0], [0], [1], [0, 0, 1, 1], [], []>} : vector<8x32xf32>, vector<32x128xf32>, vector<8x128xf32> -> vector<8x128xf32>
    %35 = arith.addf %29, %34 : vector<8x128xf32>
    %c0_31 = arith.constant 0 : index
    %c2_32 = arith.constant 2 : index
    %c0_33 = arith.constant 0 : index
    %36 = vector.load %arg7[%c0_31, %c2_32, %c0_33] : memref<8x8x32xf32, #tpu.memory_space<vmem>>, vector<8x1x32xf32>
    %37 = vector.shape_cast %36 : vector<8x1x32xf32> to vector<8x32xf32>
    %c2_34 = arith.constant 2 : index
    %c0_35 = arith.constant 0 : index
    %c0_36 = arith.constant 0 : index
    %38 = vector.load %arg4[%c2_34, %c0_35, %c0_36] : memref<8x32x128xf32, #tpu.memory_space<vmem>>, vector<1x32x128xf32>
    %39 = vector.shape_cast %38 : vector<1x32x128xf32> to vector<32x128xf32>
    %cst_37 = arith.constant dense<0.000000e+00> : vector<8x128xf32>
    %40 = tpu.matmul %37, %39, %cst_37 {dimension_numbers = #tpu.dot_dimension_numbers<[1], [0], [0], [1], [0, 0, 1, 1], [], []>} : vector<8x32xf32>, vector<32x128xf32>, vector<8x128xf32> -> vector<8x128xf32>
    %41 = arith.addf %35, %40 : vector<8x128xf32>
    %c0_38 = arith.constant 0 : index
    %c3 = arith.constant 3 : index
    %c0_39 = arith.constant 0 : index
    %42 = vector.load %arg7[%c0_38, %c3, %c0_39] : memref<8x8x32xf32, #tpu.memory_space<vmem>>, vector<8x1x32xf32>
    %43 = vector.shape_cast %42 : vector<8x1x32xf32> to vector<8x32xf32>
    %c3_40 = arith.constant 3 : index
    %c0_41 = arith.constant 0 : index
    %c0_42 = arith.constant 0 : index
    %44 = vector.load %arg4[%c3_40, %c0_41, %c0_42] : memref<8x32x128xf32, #tpu.memory_space<vmem>>, vector<1x32x128xf32>
    %45 = vector.shape_cast %44 : vector<1x32x128xf32> to vector<32x128xf32>
    %cst_43 = arith.constant dense<0.000000e+00> : vector<8x128xf32>
    %46 = tpu.matmul %43, %45, %cst_43 {dimension_numbers = #tpu.dot_dimension_numbers<[1], [0], [0], [1], [0, 0, 1, 1], [], []>} : vector<8x32xf32>, vector<32x128xf32>, vector<8x128xf32> -> vector<8x128xf32>
    %47 = arith.addf %41, %46 : vector<8x128xf32>
    %c0_44 = arith.constant 0 : index
    %c4 = arith.constant 4 : index
    %c0_45 = arith.constant 0 : index
    %48 = vector.load %arg7[%c0_44, %c4, %c0_45] : memref<8x8x32xf32, #tpu.memory_space<vmem>>, vector<8x1x32xf32>
    %49 = vector.shape_cast %48 : vector<8x1x32xf32> to vector<8x32xf32>
    %c4_46 = arith.constant 4 : index
    %c0_47 = arith.constant 0 : index
    %c0_48 = arith.constant 0 : index
    %50 = vector.load %arg4[%c4_46, %c0_47, %c0_48] : memref<8x32x128xf32, #tpu.memory_space<vmem>>, vector<1x32x128xf32>
    %51 = vector.shape_cast %50 : vector<1x32x128xf32> to vector<32x128xf32>
    %cst_49 = arith.constant dense<0.000000e+00> : vector<8x128xf32>
    %52 = tpu.matmul %49, %51, %cst_49 {dimension_numbers = #tpu.dot_dimension_numbers<[1], [0], [0], [1], [0, 0, 1, 1], [], []>} : vector<8x32xf32>, vector<32x128xf32>, vector<8x128xf32> -> vector<8x128xf32>
    %53 = arith.addf %47, %52 : vector<8x128xf32>
    %c0_50 = arith.constant 0 : index
    %c5 = arith.constant 5 : index
    %c0_51 = arith.constant 0 : index
    %54 = vector.load %arg7[%c0_50, %c5, %c0_51] : memref<8x8x32xf32, #tpu.memory_space<vmem>>, vector<8x1x32xf32>
    %55 = vector.shape_cast %54 : vector<8x1x32xf32> to vector<8x32xf32>
    %c5_52 = arith.constant 5 : index
    %c0_53 = arith.constant 0 : index
    %c0_54 = arith.constant 0 : index
    %56 = vector.load %arg4[%c5_52, %c0_53, %c0_54] : memref<8x32x128xf32, #tpu.memory_space<vmem>>, vector<1x32x128xf32>
    %57 = vector.shape_cast %56 : vector<1x32x128xf32> to vector<32x128xf32>
    %cst_55 = arith.constant dense<0.000000e+00> : vector<8x128xf32>
    %58 = tpu.matmul %55, %57, %cst_55 {dimension_numbers = #tpu.dot_dimension_numbers<[1], [0], [0], [1], [0, 0, 1, 1], [], []>} : vector<8x32xf32>, vector<32x128xf32>, vector<8x128xf32> -> vector<8x128xf32>
    %59 = arith.addf %53, %58 : vector<8x128xf32>
    %c0_56 = arith.constant 0 : index
    %c6 = arith.constant 6 : index
    %c0_57 = arith.constant 0 : index
    %60 = vector.load %arg7[%c0_56, %c6, %c0_57] : memref<8x8x32xf32, #tpu.memory_space<vmem>>, vector<8x1x32xf32>
    %61 = vector.shape_cast %60 : vector<8x1x32xf32> to vector<8x32xf32>
    %c6_58 = arith.constant 6 : index
    %c0_59 = arith.constant 0 : index
    %c0_60 = arith.constant 0 : index
    %62 = vector.load %arg4[%c6_58, %c0_59, %c0_60] : memref<8x32x128xf32, #tpu.memory_space<vmem>>, vector<1x32x128xf32>
    %63 = vector.shape_cast %62 : vector<1x32x128xf32> to vector<32x128xf32>
    %cst_61 = arith.constant dense<0.000000e+00> : vector<8x128xf32>
    %64 = tpu.matmul %61, %63, %cst_61 {dimension_numbers = #tpu.dot_dimension_numbers<[1], [0], [0], [1], [0, 0, 1, 1], [], []>} : vector<8x32xf32>, vector<32x128xf32>, vector<8x128xf32> -> vector<8x128xf32>
    %65 = arith.addf %59, %64 : vector<8x128xf32>
    %c0_62 = arith.constant 0 : index
    %c7 = arith.constant 7 : index
    %c0_63 = arith.constant 0 : index
    %66 = vector.load %arg7[%c0_62, %c7, %c0_63] : memref<8x8x32xf32, #tpu.memory_space<vmem>>, vector<8x1x32xf32>
    %67 = vector.shape_cast %66 : vector<8x1x32xf32> to vector<8x32xf32>
    %c7_64 = arith.constant 7 : index
    %c0_65 = arith.constant 0 : index
    %c0_66 = arith.constant 0 : index
    %68 = vector.load %arg4[%c7_64, %c0_65, %c0_66] : memref<8x32x128xf32, #tpu.memory_space<vmem>>, vector<1x32x128xf32>
    %69 = vector.shape_cast %68 : vector<1x32x128xf32> to vector<32x128xf32>
    %cst_67 = arith.constant dense<0.000000e+00> : vector<8x128xf32>
    %70 = tpu.matmul %67, %69, %cst_67 {dimension_numbers = #tpu.dot_dimension_numbers<[1], [0], [0], [1], [0, 0, 1, 1], [], []>} : vector<8x32xf32>, vector<32x128xf32>, vector<8x128xf32> -> vector<8x128xf32>
    %71 = arith.addf %65, %70 : vector<8x128xf32>
    %c0_68 = arith.constant 0 : index
    %c0_69 = arith.constant 0 : index
    %72 = vector.load %arg5[%c0_68, %c0_69] : memref<1x128xf32, #tpu.memory_space<vmem>>, vector<1x128xf32>
    %73 = vector.broadcast %72 : vector<1x128xf32> to vector<8x128xf32>
    %74 = arith.addf %71, %73 : vector<8x128xf32>
    %c0_70 = arith.constant 0 : index
    %c0_71 = arith.constant 0 : index
    %75 = vector.load %arg6[%c0_70, %c0_71] : memref<8x128xf32, #tpu.memory_space<vmem>>, vector<8x128xf32>
    tpu.vector_store %arg6[%c0_70, %c0_71], %74 {strides = array<i32>} : memref<8x128xf32, #tpu.memory_space<vmem>>, vector<8x128xf32>,
    return
  }
  func.func @transform_0(%arg0: i32) -> (i32, i32, i32) {
    %c0_i32 = arith.constant 0 : i32
    %c0_i32_0 = arith.constant 0 : i32
    %c0_i32_1 = arith.constant 0 : i32
    return %arg0, %c0_i32, %c0_i32_0 : i32, i32, i32
  }
  func.func @transform_1(%arg0: i32) -> (i32, i32, i32) {
    %c0_i32 = arith.constant 0 : i32
    %c0_i32_0 = arith.constant 0 : i32
    %c0_i32_1 = arith.constant 0 : i32
    %c0_i32_2 = arith.constant 0 : i32
    return %c0_i32, %c0_i32_0, %c0_i32_1 : i32, i32, i32
  }
  func.func @transform_2(%arg0: i32) -> (i32, i32) {
    %c0_i32 = arith.constant 0 : i32
    %c0_i32_0 = arith.constant 0 : i32
    %c0_i32_1 = arith.constant 0 : i32
    return %c0_i32, %c0_i32_0 : i32, i32
  }
  func.func @transform_3(%arg0: i32) -> (i32, i32, i32) {
    %c0_i32 = arith.constant 0 : i32
    %c0_i32_0 = arith.constant 0 : i32
    %c0_i32_1 = arith.constant 0 : i32
    %c0_i32_2 = arith.constant 0 : i32
    return %c0_i32, %c0_i32_0, %c0_i32_1 : i32, i32, i32
  }
  func.func @transform_4(%arg0: i32) -> (i32, i32) {
    %c0_i32 = arith.constant 0 : i32
    %c0_i32_0 = arith.constant 0 : i32
    %c0_i32_1 = arith.constant 0 : i32
    return %c0_i32, %c0_i32_0 : i32, i32
  }
  func.func @transform_5(%arg0: i32) -> (i32, i32) {
    %c0_i32 = arith.constant 0 : i32
    %c0_i32_0 = arith.constant 0 : i32
    return %arg0, %c0_i32 : i32, i32
  }
}

</mosaic_0001>

<llo_original>
// kernel: tpu_custom_call.1
$region0: #{tpu_custom_call.1}
  #allocation0 [shape = 'u32[]', space=smem, size = 0x4, offset = 0x4, fixed_abs, tag = 'smem constant byte address 0x4 - core index']
  #allocation1 [shape = 'u32[72,128]{1,0:T(1,128)}', space=vmem, size = 0x9000, scoped, tag = 'internal scratch']
  #allocation2 [shape = 'f32[8,8,32]{2,1,0:T(8,128)}', space=vmem, size = 0x8000, scoped, tag = 'scratch operand']
  %s0 = inlined_call_operand.vmem [shape: f32[8,10,64], index: 0, kind: input, shape index: {}]
  %s1 = inlined_call_operand.vmem [shape: f32[3,64,32], index: 1, kind: input, shape index: {}]
  %s2 = inlined_call_operand.vmem [shape: f32[1,32], index: 2, kind: input, shape index: {}]
  %s3 = inlined_call_operand.vmem [shape: f32[8,32,128], index: 3, kind: input, shape index: {}]
  %s4 = inlined_call_operand.vmem [shape: f32[1,128], index: 4, kind: input, shape index: {}]
  %s5 = inlined_call_operand.hbm [shape: f32[8,128], index: 5, kind: output, shape index: {}]
  %s6 = sld [smem:[#allocation0]]
  $region30: #{tpu_custom_call.1} parent=0
    _
  %s8 = ssub.s32 1, %s6
  %s9 = scalar_select 0, %s8, %s6
  $region1: #{tpu_custom_call.1} parent=0
    #allocation3 [shape = 'u8[4096]{0}', space=vmem, size = 0x1000, scoped, tag = 'output window, operand 0, single buffered']
    #allocation4 [shape = 's32[1]{0}', space=sflag, size = 0x4, scoped, tag = 'scoped memory for tpu_custom_call.1']
    %10 = vsyncpa [#allocation4], 0
    // Predicated region
    $region2: #{tpu_custom_call.1} parent=1 // pred_check
      _
    $region3: #{tpu_custom_call.1} parent=1 // pred_check_branch
      %12 = sbr.rel (0) target = $region5
    $region4: #{tpu_custom_call.1} parent=1 // pred_region
      _
    $region5: #{tpu_custom_call.1} parent=1 // pred_fallthru
      _
    // Predicated region
    $region6: #{tpu_custom_call.1} parent=1 // pred_check
      _
    $region7: #{tpu_custom_call.1} parent=1 // pred_check_branch
      %14 = sbr.rel (0) target = $region9
    $region8: #{tpu_custom_call.1} parent=1 // pred_region
      _
    $region9: #{tpu_custom_call.1} parent=1 // pred_fallthru
      _
    // Predicated region
    $region10: #{tpu_custom_call.1} parent=1 // pred_check
      _
    $region11: #{tpu_custom_call.1} parent=1 // pred_check_branch
      %16 = sbr.rel (0) target = $region13
    $region12: #{tpu_custom_call.1} parent=1 // pred_region
      _
    $region13: #{tpu_custom_call.1} parent=1 // pred_fallthru
      _
    // Predicated region
    $region14: #{tpu_custom_call.1} parent=1 // pred_check
      _
    $region15: #{tpu_custom_call.1} parent=1 // pred_check_branch
      %18 = sbr.rel (0) target = $region17
    $region16: #{tpu_custom_call.1} parent=1 // pred_region
      _
    $region17: #{tpu_custom_call.1} parent=1 // pred_fallthru
      _
    // Predicated region
    $region18: #{tpu_custom_call.1} parent=1 // pred_check
      _
    $region19: #{tpu_custom_call.1} parent=1 // pred_check_branch
      %20 = sbr.rel (0) target = $region21
    $region20: #{tpu_custom_call.1} parent=1 // pred_region
      _
    $region21: #{tpu_custom_call.1} parent=1 // pred_fallthru
      _
    %v21 = vld [vmem:[%s0] sm:$0xff]
    %v22 = vld [vmem:[%s0 + $0x8] sm:$0x3]
    %v23 = vld [vmem:[%s0 + $0x10] sm:$0xff]
    %v24 = vld [vmem:[%s0 + $0x18] sm:$0x3]
    %v25 = vld [vmem:[%s0 + $0x20] sm:$0xff]
    %v26 = vld [vmem:[%s0 + $0x28] sm:$0x3]
    %v27 = vld [vmem:[%s0 + $0x30] sm:$0xff]
    %v28 = vld [vmem:[%s0 + $0x38] sm:$0x3]
    %v29 = vld [vmem:[%s0 + $0x40] sm:$0xff]
    %v30 = vld [vmem:[%s0 + $0x48] sm:$0x3]
    %v31 = vld [vmem:[%s0 + $0x50] sm:$0xff]
    %v32 = vld [vmem:[%s0 + $0x58] sm:$0x3]
    %v33 = vld [vmem:[%s0 + $0x60] sm:$0xff]
    %v34 = vld [vmem:[%s0 + $0x68] sm:$0x3]
    %v35 = vld [vmem:[%s0 + $0x70] sm:$0xff]
    %v36 = vld [vmem:[%s0 + $0x78] sm:$0x3]
    %v37 = vld [vmem:[%s1] sm:$0xff]
    %v38 = vld [vmem:[%s1 + $0x8] sm:$0xff]
    %v39 = vld [vmem:[%s1 + $0x10] sm:$0xff]
    %v40 = vld [vmem:[%s1 + $0x18] sm:$0xff]
    %v41 = vld [vmem:[%s1 + $0x20] sm:$0xff]
    %v42 = vld [vmem:[%s1 + $0x28] sm:$0xff]
    %v43 = vld [vmem:[%s1 + $0x30] sm:$0xff]
    %v44 = vld [vmem:[%s1 + $0x38] sm:$0xff]
    %vm61 = vcmask 1046528
    %v62 = vrot.slane %v21, 1
    %v63 = vrot.slane %v22, 1
    %v64 = vsel %vm61, %v62, %v63
    %v65 = vrot.slane %v23, 1
    %v66 = vrot.slane %v24, 1
    %v67 = vsel %vm61, %v65, %v66
    %v68 = vrot.slane %v25, 1
    %v69 = vrot.slane %v26, 1
    %v70 = vsel %vm61, %v68, %v69
    %v71 = vrot.slane %v27, 1
    %v72 = vrot.slane %v28, 1
    %v73 = vsel %vm61, %v71, %v72
    %v74 = vrot.slane %v29, 1
    %v75 = vrot.slane %v30, 1
    %v76 = vsel %vm61, %v74, %v75
    %v77 = vrot.slane %v31, 1
    %v78 = vrot.slane %v32, 1
    %v79 = vsel %vm61, %v77, %v78
    %v80 = vrot.slane %v33, 1
    %v81 = vrot.slane %v34, 1
    %v82 = vsel %vm61, %v80, %v81
    %v83 = vrot.slane %v35, 1
    %v84 = vrot.slane %v36, 1
    %v85 = vsel %vm61, %v83, %v84
    %s86 = scalar_lea.vmem %s1, 64
    %v87 = vld [vmem:[%s86] sm:$0xff]
    %v88 = vld [vmem:[%s86 + $0x8] sm:$0xff]
    %v89 = vld [vmem:[%s86 + $0x10] sm:$0xff]
    %v90 = vld [vmem:[%s86 + $0x18] sm:$0xff]
    %v91 = vld [vmem:[%s86 + $0x20] sm:$0xff]
    %v92 = vld [vmem:[%s86 + $0x28] sm:$0xff]
    %v93 = vld [vmem:[%s86 + $0x30] sm:$0xff]
    %v94 = vld [vmem:[%s86 + $0x38] sm:$0xff]
    %vm95 = vcmask 523264
    %v96 = vsel %vm95, %v64, 0
    %v98 = vsel %vm95, %v67, 0
    %v100 = vsel %vm95, %v70, 0
    %v102 = vsel %vm95, %v73, 0
    %v104 = vsel %vm95, %v76, 0
    %v106 = vsel %vm95, %v79, 0
    %v108 = vsel %vm95, %v82, 0
    %v110 = vsel %vm95, %v85, 0
    %112 = vmatpush.msra.mxu0 0.0
    %113 = vmatpush.msra.mxu0 0.0
    %114 = vmatpush.msra.mxu0 0.0
    %115 = vmatpush.msra.mxu0 0.0
    %116 = vmatpush.msra.mxu0 0.0
    %117 = vmatpush.msra.mxu0 0.0
    %118 = vmatpush.msra.mxu0 0.0
    %119 = vmatpush.msra.mxu0 0.0
    %120 = vmatpush.msra.mxu0 %v94
    %121 = vmatpush.msra.mxu0 %v93
    %122 = vmatpush.msra.mxu0 %v92
    %123 = vmatpush.msra.mxu0 %v91
    %124 = vmatpush.msra.mxu0 %v90
    %125 = vmatpush.msra.mxu0 %v89
    %126 = vmatpush.msra.mxu0 %v88
    %127 = vmatpush.msra.mxu0 %v87
    %128 = vmatmul.f32.gmra.mxu0 %v96
    %v129 = vpop.f32.mrf.mxu0
    %v130 = vadd.f32 0.0, %v129
    %131 = vmatmul.f32.gmra.mxu0 %v98
    %v132 = vpop.f32.mrf.mxu0
    %v133 = vadd.f32 0.0, %v132
    %134 = vmatmul.f32.gmra.mxu0 %v100
    %v135 = vpop.f32.mrf.mxu0
    %v136 = vadd.f32 0.0, %v135
    %137 = vmatmul.f32.gmra.mxu0 %v102
    %v138 = vpop.f32.mrf.mxu0
    %v139 = vadd.f32 0.0, %v138
    %140 = vmatmul.f32.gmra.mxu0 %v104
    %v141 = vpop.f32.mrf.mxu0
    %v142 = vadd.f32 0.0, %v141
    %143 = vmatmul.f32.gmra.mxu0 %v106
    %v144 = vpop.f32.mrf.mxu0
    %v145 = vadd.f32 0.0, %v144
    %146 = vmatmul.f32.gmra.mxu0 %v108
    %v147 = vpop.f32.mrf.mxu0
    %v148 = vadd.f32 0.0, %v147
    %149 = vmatmul.f32.gmra.mxu0 %v110
    %v150 = vpop.f32.mrf.mxu0
    %v151 = vadd.f32 0.0, %v150
    %152 = vdwg.mxu0
    %v153 = vsel %vm95, %v21, 0
    %v155 = vsel %vm95, %v23, 0
    %v157 = vsel %vm95, %v25, 0
    %v159 = vsel %vm95, %v27, 0
    %v161 = vsel %vm95, %v29, 0
    %v163 = vsel %vm95, %v31, 0
    %v165 = vsel %vm95, %v33, 0
    %v167 = vsel %vm95, %v35, 0
    %169 = vmatpush.msra.mxu0 0.0
    %170 = vmatpush.msra.mxu0 0.0
    %171 = vmatpush.msra.mxu0 0.0
    %172 = vmatpush.msra.mxu0 0.0
    %173 = vmatpush.msra.mxu0 0.0
    %174 = vmatpush.msra.mxu0 0.0
    %175 = vmatpush.msra.mxu0 0.0
    %176 = vmatpush.msra.mxu0 0.0
    %177 = vmatpush.msra.mxu0 %v44
    %178 = vmatpush.msra.mxu0 %v43
    %179 = vmatpush.msra.mxu0 %v42
    %180 = vmatpush.msra.mxu0 %v41
    %181 = vmatpush.msra.mxu0 %v40
    %182 = vmatpush.msra.mxu0 %v39
    %183 = vmatpush.msra.mxu0 %v38
    %184 = vmatpush.msra.mxu0 %v37
    %185 = vmatmul.f32.gmra.mxu0 %v153
    %v186 = vpop.f32.mrf.mxu0
    %v187 = vadd.f32 %v130, %v186
    %188 = vmatmul.f32.gmra.mxu0 %v155
    %v189 = vpop.f32.mrf.mxu0
    %v190 = vadd.f32 %v133, %v189
    %191 = vmatmul.f32.gmra.mxu0 %v157
    %v192 = vpop.f32.mrf.mxu0
    %v193 = vadd.f32 %v136, %v192
    %194 = vmatmul.f32.gmra.mxu0 %v159
    %v195 = vpop.f32.mrf.mxu0
    %v196 = vadd.f32 %v139, %v195
    %197 = vmatmul.f32.gmra.mxu0 %v161
    %v198 = vpop.f32.mrf.mxu0
    %v199 = vadd.f32 %v142, %v198
    %200 = vmatmul.f32.gmra.mxu0 %v163
    %v201 = vpop.f32.mrf.mxu0
    %v202 = vadd.f32 %v145, %v201
    %203 = vmatmul.f32.gmra.mxu0 %v165
    %v204 = vpop.f32.mrf.mxu0
    %v205 = vadd.f32 %v148, %v204
    %206 = vmatmul.f32.gmra.mxu0 %v167
    %v207 = vpop.f32.mrf.mxu0
    %v208 = vadd.f32 %v151, %v207
    %209 = vdwg.mxu0
    %vm210 = vcmask 1045504
    %v211 = vrot.slane %v21, 2
    %v212 = vrot.slane %v22, 2
    %v213 = vsel %vm210, %v211, %v212
    %v214 = vrot.slane %v23, 2
    %v215 = vrot.slane %v24, 2
    %v216 = vsel %vm210, %v214, %v215
    %v217 = vrot.slane %v25, 2
    %v218 = vrot.slane %v26, 2
    %v219 = vsel %vm210, %v217, %v218
    %v220 = vrot.slane %v27, 2
    %v221 = vrot.slane %v28, 2
    %v222 = vsel %vm210, %v220, %v221
    %v223 = vrot.slane %v29, 2
    %v224 = vrot.slane %v30, 2
    %v225 = vsel %vm210, %v223, %v224
    %v226 = vrot.slane %v31, 2
    %v227 = vrot.slane %v32, 2
    %v228 = vsel %vm210, %v226, %v227
    %v229 = vrot.slane %v33, 2
    %v230 = vrot.slane %v34, 2
    %v231 = vsel %vm210, %v229, %v230
    %v232 = vrot.slane %v35, 2
    %v233 = vrot.slane %v36, 2
    %v234 = vsel %vm210, %v232, %v233
    %s235 = scalar_lea.vmem %s1, 128
    %v236 = vld [vmem:[%s235] sm:$0xff]
    %v237 = vld [vmem:[%s235 + $0x8] sm:$0xff]
    %v238 = vld [vmem:[%s235 + $0x10] sm:$0xff]
    %v239 = vld [vmem:[%s235 + $0x18] sm:$0xff]
    %v240 = vld [vmem:[%s235 + $0x20] sm:$0xff]
    %v241 = vld [vmem:[%s235 + $0x28] sm:$0xff]
    %v242 = vld [vmem:[%s235 + $0x30] sm:$0xff]
    %v243 = vld [vmem:[%s235 + $0x38] sm:$0xff]
    %v244 = vsel %vm95, %v213, 0
    %v246 = vsel %vm95, %v216, 0
    %v248 = vsel %vm95, %v219, 0
    %v250 = vsel %vm95, %v222, 0
    %v252 = vsel %vm95, %v225, 0
    %v254 = vsel %vm95, %v228, 0
    %v256 = vsel %vm95, %v231, 0
    %v258 = vsel %vm95, %v234, 0
    %260 = vmatpush.msra.mxu0 0.0
    %261 = vmatpush.msra.mxu0 0.0
    %262 = vmatpush.msra.mxu0 0.0
    %263 = vmatpush.msra.mxu0 0.0
    %264 = vmatpush.msra.mxu0 0.0
    %265 = vmatpush.msra.mxu0 0.0
    %266 = vmatpush.msra.mxu0 0.0
    %267 = vmatpush.msra.mxu0 0.0
    %268 = vmatpush.msra.mxu0 %v243
    %269 = vmatpush.msra.mxu0 %v242
    %270 = vmatpush.msra.mxu0 %v241
    %271 = vmatpush.msra.mxu0 %v240
    %272 = vmatpush.msra.mxu0 %v239
    %273 = vmatpush.msra.mxu0 %v238
    %274 = vmatpush.msra.mxu0 %v237
    %275 = vmatpush.msra.mxu0 %v236
    %276 = vmatmul.f32.gmra.mxu0 %v244
    %v277 = vpop.f32.mrf.mxu0
    %v278 = vadd.f32 0.0, %v277
    %279 = vmatmul.f32.gmra.mxu0 %v246
    %v280 = vpop.f32.mrf.mxu0
    %v281 = vadd.f32 0.0, %v280
    %282 = vmatmul.f32.gmra.mxu0 %v248
    %v283 = vpop.f32.mrf.mxu0
    %v284 = vadd.f32 0.0, %v283
    %285 = vmatmul.f32.gmra.mxu0 %v250
    %v286 = vpop.f32.mrf.mxu0
    %v287 = vadd.f32 0.0, %v286
    %288 = vmatmul.f32.gmra.mxu0 %v252
    %v289 = vpop.f32.mrf.mxu0
    %v290 = vadd.f32 0.0, %v289
    %291 = vmatmul.f32.gmra.mxu0 %v254
    %v292 = vpop.f32.mrf.mxu0
    %v293 = vadd.f32 0.0, %v292
    %294 = vmatmul.f32.gmra.mxu0 %v256
    %v295 = vpop.f32.mrf.mxu0
    %v296 = vadd.f32 0.0, %v295
    %297 = vmatmul.f32.gmra.mxu0 %v258
    %v298 = vpop.f32.mrf.mxu0
    %v299 = vadd.f32 0.0, %v298
    %300 = vdwg.mxu0
    %v301 = vadd.f32 %v187, %v278
    %v302 = vadd.f32 %v190, %v281
    %v303 = vadd.f32 %v193, %v284
    %v304 = vadd.f32 %v196, %v287
    %v305 = vadd.f32 %v199, %v290
    %v306 = vadd.f32 %v202, %v293
    %v307 = vadd.f32 %v205, %v296
    %v308 = vadd.f32 %v208, %v299
    %v309 = vld [vmem:[%s2] sm:$0x1]
    %v311 = vperm.slane %v309, 0
    %v313 = vadd.f32 %v301, %v311
    %v314 = vadd.f32 %v302, %v311
    %v315 = vadd.f32 %v303, %v311
    %v316 = vadd.f32 %v304, %v311
    %v317 = vadd.f32 %v305, %v311
    %v318 = vadd.f32 %v306, %v311
    %v319 = vadd.f32 %v307, %v311
    %v320 = vadd.f32 %v308, %v311
    %v321 = vmax.f32 %v313, 0.0
    %v322 = vmax.f32 %v314, 0.0
    %v323 = vmax.f32 %v315, 0.0
    %v324 = vmax.f32 %v316, 0.0
    %v325 = vmax.f32 %v317, 0.0
    %v326 = vmax.f32 %v318, 0.0
    %v327 = vmax.f32 %v319, 0.0
    %v328 = vmax.f32 %v320, 0.0
    %vm329 = vcmask 261120
    %330 = vst.msk [vmem:[#allocation2] sm:$0xff] %vm329, %v321
    %331 = vst.msk [vmem:[#allocation2 + $0x8] sm:$0xff] %vm329, %v322
    %332 = vst.msk [vmem:[#allocation2 + $0x10] sm:$0xff] %vm329, %v323
    %333 = vst.msk [vmem:[#allocation2 + $0x18] sm:$0xff] %vm329, %v324
    %334 = vst.msk [vmem:[#allocation2 + $0x20] sm:$0xff] %vm329, %v325
    %335 = vst.msk [vmem:[#allocation2 + $0x28] sm:$0xff] %vm329, %v326
    %336 = vst.msk [vmem:[#allocation2 + $0x30] sm:$0xff] %vm329, %v327
    %337 = vst.msk [vmem:[#allocation2 + $0x38] sm:$0xff] %vm329, %v328
    %v338 = vld [vmem:[#allocation2] sm:$0x1]
    %v339 = vld [vmem:[#allocation2 + $0x8] sm:$0x1]
    %v340 = vld [vmem:[#allocation2 + $0x10] sm:$0x1]
    %v341 = vld [vmem:[#allocation2 + $0x18] sm:$0x1]
    %v342 = vld [vmem:[#allocation2 + $0x20] sm:$0x1]
    %v343 = vld [vmem:[#allocation2 + $0x28] sm:$0x1]
    %v344 = vld [vmem:[#allocation2 + $0x30] sm:$0x1]
    %v345 = vld [vmem:[#allocation2 + $0x38] sm:$0x1]
    %v346 = vld [vmem:[%s3] sm:$0xff]
    %v347 = vld [vmem:[%s3 + $0x8] sm:$0xff]
    %v348 = vld [vmem:[%s3 + $0x10] sm:$0xff]
    %v349 = vld [vmem:[%s3 + $0x18] sm:$0xff]
    %v350 = vld [vmem:[#allocation2 + $0x1] sm:$0x1]
    %v351 = vld [vmem:[#allocation2 + $0x9] sm:$0x1]
    %v352 = vld [vmem:[#allocation2 + $0x11] sm:$0x1]
    %v353 = vld [vmem:[#allocation2 + $0x19] sm:$0x1]
    %v354 = vld [vmem:[#allocation2 + $0x21] sm:$0x1]
    %v355 = vld [vmem:[#allocation2 + $0x29] sm:$0x1]
    %v356 = vld [vmem:[#allocation2 + $0x31] sm:$0x1]
    %v357 = vld [vmem:[#allocation2 + $0x39] sm:$0x1]
    %s358 = scalar_lea.vmem %s3, 32
    %v359 = vld [vmem:[%s358] sm:$0xff]
    %v360 = vld [vmem:[%s358 + $0x8] sm:$0xff]
    %v361 = vld [vmem:[%s358 + $0x10] sm:$0xff]
    %v362 = vld [vmem:[%s358 + $0x18] sm:$0xff]
    %v371 = vrot.slane %v351, 7
    %vm372 = vcmask 1041409
    %v373 = vsel %vm372, %v371, %v350
    %v374 = vrot.slane %v352, 6
    %vm375 = vcmask 1042434
    %v376 = vsel %vm375, %v374, %v373
    %v377 = vrot.slane %v353, 5
    %vm378 = vcmask 1043459
    %v379 = vsel %vm378, %v377, %v376
    %v380 = vrot.slane %v354, 4
    %vm381 = vcmask 1044484
    %v382 = vsel %vm381, %v380, %v379
    %v383 = vrot.slane %v355, 3
    %vm384 = vcmask 1045509
    %v385 = vsel %vm384, %v383, %v382
    %v386 = vrot.slane %v356, 2
    %vm387 = vcmask 1046534
    %v388 = vsel %vm387, %v386, %v385
    %v389 = vrot.slane %v357, 1
    %vm390 = vcmask 1047559
    %v391 = vsel %vm390, %v389, %v388
    %v392 = vsel %vm329, %v391, 0
    %394 = vmatpush.msra.mxu0 0.0
    %395 = vmatpush.msra.mxu0 0.0
    %396 = vmatpush.msra.mxu0 0.0
    %397 = vmatpush.msra.mxu0 0.0
    %398 = vmatpush.msra.mxu0 0.0
    %399 = vmatpush.msra.mxu0 0.0
    %400 = vmatpush.msra.mxu0 0.0
    %401 = vmatpush.msra.mxu0 0.0
    %402 = vmatpush.msra.mxu0 0.0
    %403 = vmatpush.msra.mxu0 0.0
    %404 = vmatpush.msra.mxu0 0.0
    %405 = vmatpush.msra.mxu0 0.0
    %406 = vmatpush.msra.mxu0 %v362
    %407 = vmatpush.msra.mxu0 %v361
    %408 = vmatpush.msra.mxu0 %v360
    %409 = vmatpush.msra.mxu0 %v359
    %410 = vmatmul.f32.gmra.mxu0 %v392
    %v411 = vpop.f32.mrf.mxu0
    %v412 = vadd.f32 0.0, %v411
    %413 = vdwg.mxu0
    %v422 = vrot.slane %v339, 7
    %v423 = vsel %vm372, %v422, %v338
    %v424 = vrot.slane %v340, 6
    %v425 = vsel %vm375, %v424, %v423
    %v426 = vrot.slane %v341, 5
    %v427 = vsel %vm378, %v426, %v425
    %v428 = vrot.slane %v342, 4
    %v429 = vsel %vm381, %v428, %v427
    %v430 = vrot.slane %v343, 3
    %v431 = vsel %vm384, %v430, %v429
    %v432 = vrot.slane %v344, 2
    %v433 = vsel %vm387, %v432, %v431
    %v434 = vrot.slane %v345, 1
    %v435 = vsel %vm390, %v434, %v433
    %v436 = vsel %vm329, %v435, 0
    %438 = vmatpush.msra.mxu0 0.0
    %439 = vmatpush.msra.mxu0 0.0
    %440 = vmatpush.msra.mxu0 0.0
    %441 = vmatpush.msra.mxu0 0.0
    %442 = vmatpush.msra.mxu0 0.0
    %443 = vmatpush.msra.mxu0 0.0
    %444 = vmatpush.msra.mxu0 0.0
    %445 = vmatpush.msra.mxu0 0.0
    %446 = vmatpush.msra.mxu0 0.0
    %447 = vmatpush.msra.mxu0 0.0
    %448 = vmatpush.msra.mxu0 0.0
    %449 = vmatpush.msra.mxu0 0.0
    %450 = vmatpush.msra.mxu0 %v349
    %451 = vmatpush.msra.mxu0 %v348
    %452 = vmatpush.msra.mxu0 %v347
    %453 = vmatpush.msra.mxu0 %v346
    %454 = vmatmul.f32.gmra.mxu0 %v436
    %v455 = vpop.f32.mrf.mxu0
    %v456 = vadd.f32 %v412, %v455
    %457 = vdwg.mxu0
    %v458 = vld [vmem:[#allocation2 + $0x2] sm:$0x1]
    %v459 = vld [vmem:[#allocation2 + $0xa] sm:$0x1]
    %v460 = vld [vmem:[#allocation2 + $0x12] sm:$0x1]
    %v461 = vld [vmem:[#allocation2 + $0x1a] sm:$0x1]
    %v462 = vld [vmem:[#allocation2 + $0x22] sm:$0x1]
    %v463 = vld [vmem:[#allocation2 + $0x2a] sm:$0x1]
    %v464 = vld [vmem:[#allocation2 + $0x32] sm:$0x1]
    %v465 = vld [vmem:[#allocation2 + $0x3a] sm:$0x1]
    %s466 = scalar_lea.vmem %s3, 64
    %v467 = vld [vmem:[%s466] sm:$0xff]
    %v468 = vld [vmem:[%s466 + $0x8] sm:$0xff]
    %v469 = vld [vmem:[%s466 + $0x10] sm:$0xff]
    %v470 = vld [vmem:[%s466 + $0x18] sm:$0xff]
    %v479 = vrot.slane %v459, 7
    %v480 = vsel %vm372, %v479, %v458
    %v481 = vrot.slane %v460, 6
    %v482 = vsel %vm375, %v481, %v480
    %v483 = vrot.slane %v461, 5
    %v484 = vsel %vm378, %v483, %v482
    %v485 = vrot.slane %v462, 4
    %v486 = vsel %vm381, %v485, %v484
    %v487 = vrot.slane %v463, 3
    %v488 = vsel %vm384, %v487, %v486
    %v489 = vrot.slane %v464, 2
    %v490 = vsel %vm387, %v489, %v488
    %v491 = vrot.slane %v465, 1
    %v492 = vsel %vm390, %v491, %v490
    %v493 = vsel %vm329, %v492, 0
    %495 = vmatpush.msra.mxu0 0.0
    %496 = vmatpush.msra.mxu0 0.0
    %497 = vmatpush.msra.mxu0 0.0
    %498 = vmatpush.msra.mxu0 0.0
    %499 = vmatpush.msra.mxu0 0.0
    %500 = vmatpush.msra.mxu0 0.0
    %501 = vmatpush.msra.mxu0 0.0
    %502 = vmatpush.msra.mxu0 0.0
    %503 = vmatpush.msra.mxu0 0.0
    %504 = vmatpush.msra.mxu0 0.0
    %505 = vmatpush.msra.mxu0 0.0
    %506 = vmatpush.msra.mxu0 0.0
    %507 = vmatpush.msra.mxu0 %v470
    %508 = vmatpush.msra.mxu0 %v469
    %509 = vmatpush.msra.mxu0 %v468
    %510 = vmatpush.msra.mxu0 %v467
    %511 = vmatmul.f32.gmra.mxu0 %v493
    %v512 = vpop.f32.mrf.mxu0
    %v513 = vadd.f32 0.0, %v512
    %514 = vdwg.mxu0
    %v515 = vadd.f32 %v456, %v513
    %v516 = vld [vmem:[#allocation2 + $0x3] sm:$0x1]
    %v517 = vld [vmem:[#allocation2 + $0xb] sm:$0x1]
    %v518 = vld [vmem:[#allocation2 + $0x13] sm:$0x1]
    %v519 = vld [vmem:[#allocation2 + $0x1b] sm:$0x1]
    %v520 = vld [vmem:[#allocation2 + $0x23] sm:$0x1]
    %v521 = vld [vmem:[#allocation2 + $0x2b] sm:$0x1]
    %v522 = vld [vmem:[#allocation2 + $0x33] sm:$0x1]
    %v523 = vld [vmem:[#allocation2 + $0x3b] sm:$0x1]
    %s524 = scalar_lea.vmem %s3, 96
    %v525 = vld [vmem:[%s524] sm:$0xff]
    %v526 = vld [vmem:[%s524 + $0x8] sm:$0xff]
    %v527 = vld [vmem:[%s524 + $0x10] sm:$0xff]
    %v528 = vld [vmem:[%s524 + $0x18] sm:$0xff]
    %v537 = vrot.slane %v517, 7
    %v538 = vsel %vm372, %v537, %v516
    %v539 = vrot.slane %v518, 6
    %v540 = vsel %vm375, %v539, %v538
    %v541 = vrot.slane %v519, 5
    %v542 = vsel %vm378, %v541, %v540
    %v543 = vrot.slane %v520, 4
    %v544 = vsel %vm381, %v543, %v542
    %v545 = vrot.slane %v521, 3
    %v546 = vsel %vm384, %v545, %v544
    %v547 = vrot.slane %v522, 2
    %v548 = vsel %vm387, %v547, %v546
    %v549 = vrot.slane %v523, 1
    %v550 = vsel %vm390, %v549, %v548
    %v551 = vsel %vm329, %v550, 0
    %553 = vmatpush.msra.mxu0 0.0
    %554 = vmatpush.msra.mxu0 0.0
    %555 = vmatpush.msra.mxu0 0.0
    %556 = vmatpush.msra.mxu0 0.0
    %557 = vmatpush.msra.mxu0 0.0
    %558 = vmatpush.msra.mxu0 0.0
    %559 = vmatpush.msra.mxu0 0.0
    %560 = vmatpush.msra.mxu0 0.0
    %561 = vmatpush.msra.mxu0 0.0
    %562 = vmatpush.msra.mxu0 0.0
    %563 = vmatpush.msra.mxu0 0.0
    %564 = vmatpush.msra.mxu0 0.0
    %565 = vmatpush.msra.mxu0 %v528
    %566 = vmatpush.msra.mxu0 %v527
    %567 = vmatpush.msra.mxu0 %v526
    %568 = vmatpush.msra.mxu0 %v525
    %569 = vmatmul.f32.gmra.mxu0 %v551
    %v570 = vpop.f32.mrf.mxu0
    %v571 = vadd.f32 0.0, %v570
    %572 = vdwg.mxu0
    %v573 = vadd.f32 %v515, %v571
    %v574 = vld [vmem:[#allocation2 + $0x4] sm:$0x1]
    %v575 = vld [vmem:[#allocation2 + $0xc] sm:$0x1]
    %v576 = vld [vmem:[#allocation2 + $0x14] sm:$0x1]
    %v577 = vld [vmem:[#allocation2 + $0x1c] sm:$0x1]
    %v578 = vld [vmem:[#allocation2 + $0x24] sm:$0x1]
    %v579 = vld [vmem:[#allocation2 + $0x2c] sm:$0x1]
    %v580 = vld [vmem:[#allocation2 + $0x34] sm:$0x1]
    %v581 = vld [vmem:[#allocation2 + $0x3c] sm:$0x1]
    %s582 = scalar_lea.vmem %s3, 128
    %v583 = vld [vmem:[%s582] sm:$0xff]
    %v584 = vld [vmem:[%s582 + $0x8] sm:$0xff]
    %v585 = vld [vmem:[%s582 + $0x10] sm:$0xff]
    %v586 = vld [vmem:[%s582 + $0x18] sm:$0xff]
    %v595 = vrot.slane %v575, 7
    %v596 = vsel %vm372, %v595, %v574
    %v597 = vrot.slane %v576, 6
    %v598 = vsel %vm375, %v597, %v596
    %v599 = vrot.slane %v577, 5
    %v600 = vsel %vm378, %v599, %v598
    %v601 = vrot.slane %v578, 4
    %v602 = vsel %vm381, %v601, %v600
    %v603 = vrot.slane %v579, 3
    %v604 = vsel %vm384, %v603, %v602
    %v605 = vrot.slane %v580, 2
    %v606 = vsel %vm387, %v605, %v604
    %v607 = vrot.slane %v581, 1
    %v608 = vsel %vm390, %v607, %v606
    %v609 = vsel %vm329, %v608, 0
    %611 = vmatpush.msra.mxu0 0.0
    %612 = vmatpush.msra.mxu0 0.0
    %613 = vmatpush.msra.mxu0 0.0
    %614 = vmatpush.msra.mxu0 0.0
    %615 = vmatpush.msra.mxu0 0.0
    %616 = vmatpush.msra.mxu0 0.0
    %617 = vmatpush.msra.mxu0 0.0
    %618 = vmatpush.msra.mxu0 0.0
    %619 = vmatpush.msra.mxu0 0.0
    %620 = vmatpush.msra.mxu0 0.0
    %621 = vmatpush.msra.mxu0 0.0
    %622 = vmatpush.msra.mxu0 0.0
    %623 = vmatpush.msra.mxu0 %v586
    %624 = vmatpush.msra.mxu0 %v585
    %625 = vmatpush.msra.mxu0 %v584
    %626 = vmatpush.msra.mxu0 %v583
    %627 = vmatmul.f32.gmra.mxu0 %v609
    %v628 = vpop.f32.mrf.mxu0
    %v629 = vadd.f32 0.0, %v628
    %630 = vdwg.mxu0
    %v631 = vadd.f32 %v573, %v629
    %v632 = vld [vmem:[#allocation2 + $0x5] sm:$0x1]
    %v633 = vld [vmem:[#allocation2 + $0xd] sm:$0x1]
    %v634 = vld [vmem:[#allocation2 + $0x15] sm:$0x1]
    %v635 = vld [vmem:[#allocation2 + $0x1d] sm:$0x1]
    %v636 = vld [vmem:[#allocation2 + $0x25] sm:$0x1]
    %v637 = vld [vmem:[#allocation2 + $0x2d] sm:$0x1]
    %v638 = vld [vmem:[#allocation2 + $0x35] sm:$0x1]
    %v639 = vld [vmem:[#allocation2 + $0x3d] sm:$0x1]
    %s640 = scalar_lea.vmem %s3, 160
    %v641 = vld [vmem:[%s640] sm:$0xff]
    %v642 = vld [vmem:[%s640 + $0x8] sm:$0xff]
    %v643 = vld [vmem:[%s640 + $0x10] sm:$0xff]
    %v644 = vld [vmem:[%s640 + $0x18] sm:$0xff]
    %v653 = vrot.slane %v633, 7
    %v654 = vsel %vm372, %v653, %v632
    %v655 = vrot.slane %v634, 6
    %v656 = vsel %vm375, %v655, %v654
    %v657 = vrot.slane %v635, 5
    %v658 = vsel %vm378, %v657, %v656
    %v659 = vrot.slane %v636, 4
    %v660 = vsel %vm381, %v659, %v658
    %v661 = vrot.slane %v637, 3
    %v662 = vsel %vm384, %v661, %v660
    %v663 = vrot.slane %v638, 2
    %v664 = vsel %vm387, %v663, %v662
    %v665 = vrot.slane %v639, 1
    %v666 = vsel %vm390, %v665, %v664
    %v667 = vsel %vm329, %v666, 0
    %669 = vmatpush.msra.mxu0 0.0
    %670 = vmatpush.msra.mxu0 0.0
    %671 = vmatpush.msra.mxu0 0.0
    %672 = vmatpush.msra.mxu0 0.0
    %673 = vmatpush.msra.mxu0 0.0
    %674 = vmatpush.msra.mxu0 0.0
    %675 = vmatpush.msra.mxu0 0.0
    %676 = vmatpush.msra.mxu0 0.0
    %677 = vmatpush.msra.mxu0 0.0
    %678 = vmatpush.msra.mxu0 0.0
    %679 = vmatpush.msra.mxu0 0.0
    %680 = vmatpush.msra.mxu0 0.0
    %681 = vmatpush.msra.mxu0 %v644
    %682 = vmatpush.msra.mxu0 %v643
    %683 = vmatpush.msra.mxu0 %v642
    %684 = vmatpush.msra.mxu0 %v641
    %685 = vmatmul.f32.gmra.mxu0 %v667
    %v686 = vpop.f32.mrf.mxu0
    %v687 = vadd.f32 0.0, %v686
    %688 = vdwg.mxu0
    %v689 = vadd.f32 %v631, %v687
    %v690 = vld [vmem:[#allocation2 + $0x6] sm:$0x1]
    %v691 = vld [vmem:[#allocation2 + $0xe] sm:$0x1]
    %v692 = vld [vmem:[#allocation2 + $0x16] sm:$0x1]
    %v693 = vld [vmem:[#allocation2 + $0x1e] sm:$0x1]
    %v694 = vld [vmem:[#allocation2 + $0x26] sm:$0x1]
    %v695 = vld [vmem:[#allocation2 + $0x2e] sm:$0x1]
    %v696 = vld [vmem:[#allocation2 + $0x36] sm:$0x1]
    %v697 = vld [vmem:[#allocation2 + $0x3e] sm:$0x1]
    %s698 = scalar_lea.vmem %s3, 192
    %v699 = vld [vmem:[%s698] sm:$0xff]
    %v700 = vld [vmem:[%s698 + $0x8] sm:$0xff]
    %v701 = vld [vmem:[%s698 + $0x10] sm:$0xff]
    %v702 = vld [vmem:[%s698 + $0x18] sm:$0xff]
    %v711 = vrot.slane %v691, 7
    %v712 = vsel %vm372, %v711, %v690
    %v713 = vrot.slane %v692, 6
    %v714 = vsel %vm375, %v713, %v712
    %v715 = vrot.slane %v693, 5
    %v716 = vsel %vm378, %v715, %v714
    %v717 = vrot.slane %v694, 4
    %v718 = vsel %vm381, %v717, %v716
    %v719 = vrot.slane %v695, 3
    %v720 = vsel %vm384, %v719, %v718
    %v721 = vrot.slane %v696, 2
    %v722 = vsel %vm387, %v721, %v720
    %v723 = vrot.slane %v697, 1
    %v724 = vsel %vm390, %v723, %v722
    %v725 = vsel %vm329, %v724, 0
    %727 = vmatpush.msra.mxu0 0.0
    %728 = vmatpush.msra.mxu0 0.0
    %729 = vmatpush.msra.mxu0 0.0
    %730 = vmatpush.msra.mxu0 0.0
    %731 = vmatpush.msra.mxu0 0.0
    %732 = vmatpush.msra.mxu0 0.0
    %733 = vmatpush.msra.mxu0 0.0
    %734 = vmatpush.msra.mxu0 0.0
    %735 = vmatpush.msra.mxu0 0.0
    %736 = vmatpush.msra.mxu0 0.0
    %737 = vmatpush.msra.mxu0 0.0
    %738 = vmatpush.msra.mxu0 0.0
    %739 = vmatpush.msra.mxu0 %v702
    %740 = vmatpush.msra.mxu0 %v701
    %741 = vmatpush.msra.mxu0 %v700
    %742 = vmatpush.msra.mxu0 %v699
    %743 = vmatmul.f32.gmra.mxu0 %v725
    %v744 = vpop.f32.mrf.mxu0
    %v745 = vadd.f32 0.0, %v744
    %746 = vdwg.mxu0
    %v747 = vadd.f32 %v689, %v745
    %v748 = vld [vmem:[#allocation2 + $0x7] sm:$0x1]
    %v749 = vld [vmem:[#allocation2 + $0xf] sm:$0x1]
    %v750 = vld [vmem:[#allocation2 + $0x17] sm:$0x1]
    %v751 = vld [vmem:[#allocation2 + $0x1f] sm:$0x1]
    %v752 = vld [vmem:[#allocation2 + $0x27] sm:$0x1]
    %v753 = vld [vmem:[#allocation2 + $0x2f] sm:$0x1]
    %v754 = vld [vmem:[#allocation2 + $0x37] sm:$0x1]
    %v755 = vld [vmem:[#allocation2 + $0x3f] sm:$0x1]
    %s756 = scalar_lea.vmem %s3, 224
    %v757 = vld [vmem:[%s756] sm:$0xff]
    %v758 = vld [vmem:[%s756 + $0x8] sm:$0xff]
    %v759 = vld [vmem:[%s756 + $0x10] sm:$0xff]
    %v760 = vld [vmem:[%s756 + $0x18] sm:$0xff]
    %v769 = vrot.slane %v749, 7
    %v770 = vsel %vm372, %v769, %v748
    %v771 = vrot.slane %v750, 6
    %v772 = vsel %vm375, %v771, %v770
    %v773 = vrot.slane %v751, 5
    %v774 = vsel %vm378, %v773, %v772
    %v775 = vrot.slane %v752, 4
    %v776 = vsel %vm381, %v775, %v774
    %v777 = vrot.slane %v753, 3
    %v778 = vsel %vm384, %v777, %v776
    %v779 = vrot.slane %v754, 2
    %v780 = vsel %vm387, %v779, %v778
    %v781 = vrot.slane %v755, 1
    %v782 = vsel %vm390, %v781, %v780
    %v783 = vsel %vm329, %v782, 0
    %785 = vmatpush.msra.mxu0 0.0
    %786 = vmatpush.msra.mxu0 0.0
    %787 = vmatpush.msra.mxu0 0.0
    %788 = vmatpush.msra.mxu0 0.0
    %789 = vmatpush.msra.mxu0 0.0
    %790 = vmatpush.msra.mxu0 0.0
    %791 = vmatpush.msra.mxu0 0.0
    %792 = vmatpush.msra.mxu0 0.0
    %793 = vmatpush.msra.mxu0 0.0
    %794 = vmatpush.msra.mxu0 0.0
    %795 = vmatpush.msra.mxu0 0.0
    %796 = vmatpush.msra.mxu0 0.0
    %797 = vmatpush.msra.mxu0 %v760
    %798 = vmatpush.msra.mxu0 %v759
    %799 = vmatpush.msra.mxu0 %v758
    %800 = vmatpush.msra.mxu0 %v757
    %801 = vmatmul.f32.gmra.mxu0 %v783
    %v802 = vpop.f32.mrf.mxu0
    %v803 = vadd.f32 0.0, %v802
    %804 = vdwg.mxu0
    %v805 = vadd.f32 %v747, %v803
    %v806 = vld [vmem:[%s4] sm:$0x1]
    %v808 = vperm.slane %v806, 0
    %v810 = vadd.f32 %v805, %v808
    %811 = vst [vmem:[#allocation3] sm:$0xff] %v810
    // Predicated region
    $region22: #{tpu_custom_call.1} parent=1 // pred_check
      _
    $region23: #{tpu_custom_call.1} parent=1 // pred_check_branch
      %813 = sbr.rel (0) target = $region25
    $region24: #{tpu_custom_call.1} parent=1 // pred_region
      %815 = vsyncadd [#allocation4], 0
      %s817 = sshll.u32 [#allocation3], 4
      %s818 = int_to_ptr.vmem [resolvable:$true] %s817
      %s819 = sshll.u32 %s5, 4
      %s820 = int_to_ptr.hbm [resolvable:$true] %s819
      %822 = dma.vmem_to_hbm [thread:$0]  %s818, 128, %s820, [#allocation4]
    $region25: #{tpu_custom_call.1} parent=1 // pred_fallthru
      _
    // Predicated region
    $region26: #{tpu_custom_call.1} parent=1 // pred_check
      _
    $region27: #{tpu_custom_call.1} parent=1 // pred_check_branch
      %824 = sbr.rel (0) target = $region29
    $region28: #{tpu_custom_call.1} parent=1 // pred_region
      %826 = dma.done [#allocation4], 128
    $region29: #{tpu_custom_call.1} parent=1 // pred_fallthru
      _
    %827 = vsyncpa [#allocation4], 1

</llo_original>
